<compile_context>
chip_gen: v5e
topology: v5e:2x2
jax: 0.10.0
libtpu: 0.0.40
codegen_flags: <defaults>
</compile_context>

<pallas_src>
import functools

import jax
import jax.numpy as jnp
from jax.experimental import pallas as pl
from jax.experimental.pallas import tpu as pltpu

GAMMA = 2.0  # statically 2 -> implemented as an explicit square below


def focal_loss_kernel(logits_ref, targets_ref, at_ref, out_ref,
                      *, n_total, tile_n):
    i = pl.program_id(0)

    logits = logits_ref[...].astype(jnp.float32)   # (TILE_N, C)
    targets = targets_ref[...]                     # (TILE_N, 1) int32
    at = at_ref[...]                               # (TILE_N, 1) f32 = alpha[targets]
    tn, c = logits.shape

    # Numerically-stable log-sum-exp over the class (lane) axis.
    m = jnp.max(logits, axis=-1, keepdims=True)                       # (TILE_N, 1)
    shifted = logits - m                                              # (TILE_N, C)
    lse = jnp.log(jnp.sum(jnp.exp(shifted), axis=-1, keepdims=True))  # (TILE_N, 1)

    # Target-class gather via predicated select + row reduction; the class-id
    # iota is a single (1, C) row that broadcasts against (TILE_N, 1) targets.
    class_ids = jax.lax.broadcasted_iota(jnp.int32, (1, c), 1)        # (1, C)
    mask = class_ids == targets                                       # (TILE_N, C) bool
    target_shifted = jnp.sum(jnp.where(mask, shifted, 0.0),
                             axis=-1, keepdims=True)                  # (TILE_N, 1)

    ce = lse - target_shifted                                         # (TILE_N, 1)
    pt = jnp.exp(-ce)
    w = 1.0 - pt
    fl = at * (w * w) * ce                                            # GAMMA == 2

    # Per-tile partial sum (masked only on the last, possibly partial, tile).
    # Padded rows hold garbage logits -> fl may be NaN there; the select picks
    # the 0.0 branch *before* the sum so nothing leaks into the reduction.
    if n_total % tile_n == 0:
        out_ref[...] = jnp.sum(fl).reshape(1, 1, 1)
    else:
        last = pl.num_programs(0) - 1

        @pl.when(i != last)
        def _():
            out_ref[...] = jnp.sum(fl).reshape(1, 1, 1)

        @pl.when(i == last)
        def _():
            row_ids = jax.lax.broadcasted_iota(jnp.int32, (tn, 1), 0) + i * tile_n
            out_ref[...] = jnp.sum(
                jnp.where(row_ids < n_total, fl, 0.0)).reshape(1, 1, 1)


def focal_loss(logits, targets, alpha, *, tile_n=None):
    """logits: (N, C) float (any dtype); targets: (N,) int; alpha: (C,) float."""
    n, c = logits.shape
    targets_i32 = targets.astype(jnp.int32)
    targets2d = targets_i32.reshape(n, 1)
    # alpha[targets] is a trivial size-N gather: do it in the wrapper and feed
    # the result as a (N, 1) f32 tile instead of doing a (TILE_N, C) select
    # plus a cross-lane reduce per grid step inside the kernel.
    at = jnp.take(alpha.astype(jnp.float32), targets_i32, axis=0).reshape(n, 1)

    # Tile sizing: target ~8 grid steps so auto double-buffering can overlap
    # the logits DMA with compute, but cap at 512 rows so double-buffered
    # input tiles plus ~6-8x tile-bytes of live f32 temporaries stay inside
    # v7x's 64 MiB VMEM (32 MiB default scoped limit) at typical C.  On
    # v5e/v6e (128 MiB) a larger tile + vmem_limit_bytes would amortize the
    # ~0.35 us/step grid overhead further for very large N.
    if tile_n is None:
        tile_n = min(512, max(8, pl.cdiv(n, 8)))
    tile_n = min(tile_n, n)
    if tile_n != n:
        tile_n = max(8, (tile_n // 8) * 8)   # sublane-aligned block
    num_tiles = pl.cdiv(n, tile_n)

    kernel = functools.partial(focal_loss_kernel, n_total=n, tile_n=tile_n)

    partials = pl.pallas_call(
        kernel,
        # Per-tile partials: leading dim indexed by the grid, trailing (1, 1)
        # block equals the full trailing dims (no (8,128) alignment issue).
        out_shape=jax.ShapeDtypeStruct((num_tiles, 1, 1), jnp.float32),
        grid_spec=pltpu.PrefetchScalarGridSpec(
            num_scalar_prefetch=0,
            grid=(num_tiles,),
            in_specs=[
                pl.BlockSpec((tile_n, c), lambda i: (i, 0)),   # logits tile
                pl.BlockSpec((tile_n, 1), lambda i: (i, 0)),   # targets tile
                pl.BlockSpec((tile_n, 1), lambda i: (i, 0)),   # alpha[targets] tile
            ],
            out_specs=pl.BlockSpec((1, 1, 1), lambda i: (i, 0, 0)),
        ),
        compiler_params=pltpu.CompilerParams(
            # Each grid step writes a disjoint output block -> safe to mark
            # parallel so the batch axis shards across both v7x TensorCores.
            dimension_semantics=("parallel",),
        ),
    )(logits, targets2d, at)

    # reduction='mean' over the true N (padded tail rows contribute 0).
    return jnp.sum(partials) / n


def focal_loss_ref(logits, targets, alpha):
    """Pure-JAX reference mirroring the PyTorch forward."""
    logits = logits.astype(jnp.float32)
    logp = jax.nn.log_softmax(logits, axis=-1)
    ce = -jnp.take_along_axis(logp, targets[:, None], axis=-1)[:, 0]
    pt = jnp.exp(-ce)
    at = alpha[targets]
    fl = at * (1.0 - pt) ** GAMMA * ce
    return jnp.mean(fl)


if __name__ == "__main__":
    key = jax.random.PRNGKey(0)
    k1, k2, k3, k4, k5, k6 = jax.random.split(key, 6)

    # Small shapes consistent with a (batch, num_classes) loss.
    N, C = 8, 16
    logits = jax.random.normal(k1, (N, C), dtype=jnp.float32)
    targets = jax.random.randint(k2, (N,), 0, C, dtype=jnp.int32)
    alpha = jnp.linspace(0.25, 1.0, C, dtype=jnp.float32)

    out = jax.block_until_ready(focal_loss(logits, targets, alpha))
    ref = focal_loss_ref(logits, targets, alpha)
    assert jnp.allclose(out, ref, rtol=1e-5, atol=1e-6), (out, ref)

    # Multi-tile grid with a partial (masked) last tile: N=20, tile=8 -> grid=3.
    N2 = 20
    logits2 = jax.random.normal(k3, (N2, C), dtype=jnp.float32)
    targets2 = jax.random.randint(k4, (N2,), 0, C, dtype=jnp.int32)
    out2 = jax.block_until_ready(focal_loss(logits2, targets2, alpha, tile_n=8))
    ref2 = focal_loss_ref(logits2, targets2, alpha)
    assert jnp.allclose(out2, ref2, rtol=1e-5, atol=1e-6), (out2, ref2)

    # Default tile selection with an exact multi-tile grid (no tail mask path):
    # N=96 -> tile_n=8, grid=12, parallel partial sums.
    N3 = 96
    logits3 = jax.random.normal(k5, (N3, C), dtype=jnp.float32)
    targets3 = jax.random.randint(k6, (N3,), 0, C, dtype=jnp.int32)
    out3 = jax.block_until_ready(focal_loss(logits3, targets3, alpha))
    ref3 = focal_loss_ref(logits3, targets3, alpha)
    assert jnp.allclose(out3, ref3, rtol=1e-5, atol=1e-6), (out3, ref3)

    print("KERNEL_OK")
</pallas_src>

<mosaic_0001>
module attributes {stable_mosaic.version = 11 : i64} {
  func.func @focal_loss_kernel(%arg0: i32, %arg1: memref<8x16xf32, #tpu.memory_space<vmem>>, %arg2: memref<8x1xi32, #tpu.memory_space<vmem>>, %arg3: memref<8x1xf32, #tpu.memory_space<vmem>>, %arg4: memref<1x1x1xf32, #tpu.memory_space<vmem>>) attributes {dimension_semantics = [#tpu.dimension_semantics<parallel>], iteration_bounds = array<i64: 1>, scalar_prefetch = 0 : i64, scratch_operands = 0 : i64, tpu.core_type = #tpu.core_type<tc>, window_params = [{transform_indices = @transform_0, window_bounds = array<i64: 8, 16>}, {transform_indices = @transform_1, window_bounds = array<i64: 8, 1>}, {transform_indices = @transform_2, window_bounds = array<i64: 8, 1>}, {transform_indices = @transform_3, window_bounds = array<i64: 1, 1, 1>}]} {
    %c0 = arith.constant 0 : index
    %c0_0 = arith.constant 0 : index
    %0 = vector.load %arg1[%c0, %c0_0] : memref<8x16xf32, #tpu.memory_space<vmem>>, vector<8x16xf32>
    %c0_1 = arith.constant 0 : index
    %c0_2 = arith.constant 0 : index
    %1 = vector.load %arg2[%c0_1, %c0_2] : memref<8x1xi32, #tpu.memory_space<vmem>>, vector<8x1xi32>
    %c0_3 = arith.constant 0 : index
    %c0_4 = arith.constant 0 : index
    %2 = vector.load %arg3[%c0_3, %c0_4] : memref<8x1xf32, #tpu.memory_space<vmem>>, vector<8x1xf32>
    %cst = arith.constant dense<0xFF800000> : vector<8xf32>
    %3 = vector.multi_reduction <maximumf>, %0, %cst [1] : vector<8x16xf32> to vector<8xf32>
    %4 = vector.shape_cast %3 : vector<8xf32> to vector<8x1xf32>
    %5 = vector.broadcast %4 : vector<8x1xf32> to vector<8x16xf32>
    %6 = arith.subf %0, %5 : vector<8x16xf32>
    %7 = math.exp %6 : vector<8x16xf32>
    %cst_5 = arith.constant dense<0.000000e+00> : vector<8xf32>
    %8 = vector.multi_reduction <add>, %7, %cst_5 [1] : vector<8x16xf32> to vector<8xf32>
    %9 = vector.shape_cast %8 : vector<8xf32> to vector<8x1xf32>
    %10 = math.log %9 : vector<8x1xf32>
    %11 = tpu.iota {dimensions = array<i32: 1>} : vector<1x16xi32>
    %12 = vector.broadcast %11 : vector<1x16xi32> to vector<8x16xi32>
    %13 = vector.broadcast %1 : vector<8x1xi32> to vector<8x16xi32>
    %14 = arith.cmpi eq, %12, %13 : vector<8x16xi32>
    %cst_6 = arith.constant 0.000000e+00 : f32
    %15 = vector.broadcast %cst_6 : f32 to vector<8x16xf32>
    %16 = arith.select %14, %6, %15 : vector<8x16xi1>, vector<8x16xf32>
    %cst_7 = arith.constant dense<0.000000e+00> : vector<8xf32>
    %17 = vector.multi_reduction <add>, %16, %cst_7 [1] : vector<8x16xf32> to vector<8xf32>
    %18 = vector.shape_cast %17 : vector<8xf32> to vector<8x1xf32>
    %19 = arith.subf %10, %18 : vector<8x1xf32>
    %cst_8 = arith.constant 0.000000e+00 : f32
    %20 = vector.broadcast %cst_8 : f32 to vector<8x1xf32>
    %21 = arith.subf %20, %19 : vector<8x1xf32>
    %22 = math.exp %21 : vector<8x1xf32>
    %cst_9 = arith.constant 1.000000e+00 : f32
    %23 = vector.broadcast %cst_9 : f32 to vector<8x1xf32>
    %24 = arith.subf %23, %22 : vector<8x1xf32>
    %25 = arith.mulf %24, %24 : vector<8x1xf32>
    %26 = arith.mulf %2, %25 : vector<8x1xf32>
    %27 = arith.mulf %26, %19 : vector<8x1xf32>
    %28 = vector.shape_cast %27 : vector<8x1xf32> to vector<1x8x1xf32>
    %cst_10 = arith.constant dense<0.000000e+00> : vector<1xf32>
    %29 = vector.multi_reduction <add>, %28, %cst_10 [1, 2] : vector<1x8x1xf32> to vector<1xf32>
    %30 = vector.shape_cast %29 : vector<1xf32> to vector<1x1x1xf32>
    %31 = vector.extract %30[0, 0, 0] : f32 from vector<1x1x1xf32>
    %32 = vector.broadcast %31 : f32 to vector<1x1x1xf32>
    %c0_11 = arith.constant 0 : index
    %c0_12 = arith.constant 0 : index
    %c0_13 = arith.constant 0 : index
    %33 = vector.load %arg4[%c0_11, %c0_12, %c0_13] : memref<1x1x1xf32, #tpu.memory_space<vmem>>, vector<1x1x1xf32>
    tpu.vector_store %arg4[%c0_11, %c0_12, %c0_13], %32 {strides = array<i32>} : memref<1x1x1xf32, #tpu.memory_space<vmem>>, vector<1x1x1xf32>,
    return
  }
  func.func @transform_0(%arg0: i32) -> (i32, i32) {
    %c0_i32 = arith.constant 0 : i32
    %c0_i32_0 = arith.constant 0 : i32
    return %arg0, %c0_i32 : i32, i32
  }
  func.func @transform_1(%arg0: i32) -> (i32, i32) {
    %c0_i32 = arith.constant 0 : i32
    %c0_i32_0 = arith.constant 0 : i32
    return %arg0, %c0_i32 : i32, i32
  }
  func.func @transform_2(%arg0: i32) -> (i32, i32) {
    %c0_i32 = arith.constant 0 : i32
    %c0_i32_0 = arith.constant 0 : i32
    return %arg0, %c0_i32 : i32, i32
  }
  func.func @transform_3(%arg0: i32) -> (i32, i32, i32) {
    %c0_i32 = arith.constant 0 : i32
    %c0_i32_0 = arith.constant 0 : i32
    %c0_i32_1 = arith.constant 0 : i32
    return %arg0, %c0_i32, %c0_i32_0 : i32, i32, i32
  }
}

</mosaic_0001>

<llo_original>
// kernel: tpu_custom_call.1
$region0: #{tpu_custom_call.1}
  #allocation0 [shape = 'u32[]', space=smem, size = 0x4, offset = 0x4, fixed_abs, tag = 'smem constant byte address 0x4 - core index']
  #allocation1 [shape = 'u32[72,128]{1,0:T(1,128)}', space=vmem, size = 0x9000, scoped, tag = 'internal scratch']
  %s0 = inlined_call_operand.vmem [shape: f32[8,16], index: 0, kind: input, shape index: {}]
  %s1 = inlined_call_operand.vmem [shape: s32[8,1], index: 1, kind: input, shape index: {}]
  %s2 = inlined_call_operand.vmem [shape: f32[8,1], index: 2, kind: input, shape index: {}]
  %s3 = inlined_call_operand.hbm [shape: f32[1,1,1], index: 3, kind: output, shape index: {}]
  %s4 = sld [smem:[#allocation0]]
  $region22: #{tpu_custom_call.1} parent=0
    _
  %s6 = ssub.s32 1, %s4
  %s7 = scalar_select 0, %s6, %s4
  $region1: #{tpu_custom_call.1} parent=0
    #allocation2 [shape = 'u8[512]{0}', space=vmem, size = 0x400, scoped, tag = 'output window, operand 0, single buffered']
    #allocation3 [shape = 's32[1]{0}', space=sflag, size = 0x4, scoped, tag = 'scoped memory for tpu_custom_call.1']
    %8 = vsyncpa [#allocation3], 0
    // Predicated region
    $region2: #{tpu_custom_call.1} parent=1 // pred_check
      _
    $region3: #{tpu_custom_call.1} parent=1 // pred_check_branch
      %10 = sbr.rel (0) target = $region5
    $region4: #{tpu_custom_call.1} parent=1 // pred_region
      _
    $region5: #{tpu_custom_call.1} parent=1 // pred_fallthru
      _
    // Predicated region
    $region6: #{tpu_custom_call.1} parent=1 // pred_check
      _
    $region7: #{tpu_custom_call.1} parent=1 // pred_check_branch
      %12 = sbr.rel (0) target = $region9
    $region8: #{tpu_custom_call.1} parent=1 // pred_region
      _
    $region9: #{tpu_custom_call.1} parent=1 // pred_fallthru
      _
    // Predicated region
    $region10: #{tpu_custom_call.1} parent=1 // pred_check
      _
    $region11: #{tpu_custom_call.1} parent=1 // pred_check_branch
      %14 = sbr.rel (0) target = $region13
    $region12: #{tpu_custom_call.1} parent=1 // pred_region
      _
    $region13: #{tpu_custom_call.1} parent=1 // pred_fallthru
      _
    %v15 = vld [vmem:[%s0] sm:$0xff]
    %v16 = vld [vmem:[%s1] sm:$0xff]
    %v17 = vld [vmem:[%s2] sm:$0xff]
    %vm18 = vcmask 130048
    %v19 = vsel %vm18, %v15, -inf
    %20 = vmax.xlane.f32.xlu0 %v19
    %v21 = vpop.xlane.xlu0 %20
    %v22 = vsub.f32 %v15, %v21
    %v23 = vmul.f32 %v22, 1.442695
    %v24 = vpow.pop %v23
    %v25 = vsel %vm18, %v24, 0.0
    %26 = vadd.xlane.f32.xlu0 %v25
    %v27 = vpop.xlane.xlu0 %26
    %v28 = vlog2.pop %v27
    %v29 = vmul.f32 %v28, 0.6931472
    %v30 = vlaneseq
    %v31 = vand.u32 %v30, 127
    %32 = vset.pattern.permute.xlu0 0
    %33 = vperm.xlu0 %32, %v16
    %v34 = vpop.permute.xlu0 %33
    %vm35 = vcmp.eq.s32.totalorder %v31, %v34
    %v36 = vsel %vm35, %v22, 0.0
    %v37 = vsel %vm18, %v36, 0.0
    %38 = vadd.xlane.f32.xlu0 %v37
    %v39 = vpop.xlane.xlu0 %38
    %v40 = vsub.f32 %v29, %v39
    %v41 = vsub.f32 0.0, %v40
    %v42 = vmul.f32 %v41, 1.442695
    %v43 = vpow.pop %v42
    %v44 = vsub.f32 1.0, %v43
    %v45 = vmul.f32 %v44, %v44
    %v46 = vmul.f32 %v17, %v45
    %v47 = vmul.f32 %v46, %v40
    %vm48 = vcmask 7168
    %v49 = vsel %vm48, %v47, 0.0
    %50 = vadd.xlane.f32.xlu0 %v49
    %v51 = vpop.xlane.xlu0 %50
    %v52 = vrot.slane %v51, 4
    %v53 = vadd.f32 %v51, %v52
    %v54 = vrot.slane %v53, 2
    %v55 = vadd.f32 %v53, %v54
    %v56 = vrot.slane %v55, 1
    %v57 = vadd.f32 %v55, %v56
    %s58 = vtos %v57
    %v59 = vstv %s58
    %vm60 = vcmask 0
    %61 = vst.msk [vmem:[#allocation2] sm:$0x1] %vm60, %v59
    // Predicated region
    $region14: #{tpu_custom_call.1} parent=1 // pred_check
      _
    $region15: #{tpu_custom_call.1} parent=1 // pred_check_branch
      %63 = sbr.rel (0) target = $region17
    $region16: #{tpu_custom_call.1} parent=1 // pred_region
      %65 = vsyncadd [#allocation3], 0
      %s67 = sshll.u32 [#allocation2], 4
      %s68 = int_to_ptr.vmem [resolvable:$true] %s67
      %s69 = sshll.u32 %s3, 4
      %s70 = int_to_ptr.hbm [resolvable:$true] %s69
      %72 = dma.vmem_to_hbm [thread:$0]  %s68, 16, %s70, [#allocation3]
    $region17: #{tpu_custom_call.1} parent=1 // pred_fallthru
      _
    // Predicated region
    $region18: #{tpu_custom_call.1} parent=1 // pred_check
      _
    $region19: #{tpu_custom_call.1} parent=1 // pred_check_branch
      %74 = sbr.rel (0) target = $region21
    $region20: #{tpu_custom_call.1} parent=1 // pred_region
      %76 = dma.done [#allocation3], 16
    $region21: #{tpu_custom_call.1} parent=1 // pred_fallthru
      _
    %77 = vsyncpa [#allocation3], 1

</llo_original>
